<compile_context>
chip_gen: v5e
topology: v5e:2x2
jax: 0.10.0
libtpu: 0.0.40
codegen_flags: <defaults>
</compile_context>

<pallas_src>
import functools

import jax
import jax.numpy as jnp
from jax.experimental import pallas as pl
from jax.experimental.pallas import tpu as pltpu


BN_EPS = 1e-5
NUM_HIDDEN_LAYERS = 4  # linear1, linear1_2, linear1_3, linear1_4


def mlp_kernel(xv_ref, w_ref, o_ref, *, batch, output_size, num_hidden_layers):
    """Whole 5-layer MLP in one VMEM-resident block.

    xv_ref : (B + 3L + output_size + 1, H) f32
             rows [0, B)            : x, lane-zero-padded to H
             rows [B, B+L)          : biases b1..bL
             rows [B+L, B+2L)       : gammas
             rows [B+2L, B+3L)      : betas
             rows [B+3L, B+3L+out)  : linear2 weight rows (w5^T)
             row   B+3L+out         : linear2 bias (lane-padded)
    w_ref  : (L, H, H) bf16 (w1 row-zero-padded to (H, H))
    o_ref  : (B, output_size) f32
    """
    L = num_hidden_layers
    B = batch

    h = xv_ref[:B, :]                                     # (B, H) f32

    for layer in range(L):
        w = w_ref[layer]                                  # (H, H) bf16
        b = xv_ref[B + layer:B + layer + 1, :]            # (1, H) f32
        g = xv_ref[B + L + layer:B + L + layer + 1, :]
        be = xv_ref[B + 2 * L + layer:B + 2 * L + layer + 1, :]

        # MXU: bf16 operands, f32 accumulation.
        h = jnp.dot(h.astype(jnp.bfloat16), w,
                    preferred_element_type=jnp.float32) + b
        h = jnp.clip(h, 0.0, 6.0)                         # relu6

        # BatchNorm (batch stats, biased variance), affine fused into h*s + t.
        mean = jnp.mean(h, axis=0, keepdims=True)         # sublane reduction
        msq = jnp.mean(h * h, axis=0, keepdims=True)
        var = jnp.maximum(msq - mean * mean, 0.0)         # clamp f32 cancellation
        s = g * jax.lax.rsqrt(var + BN_EPS)               # rsqrt -> EUP slot
        t = be - mean * s
        h = h * s + t

    # Head: tiny output -> VPU multiply + lane reduction instead of an MXU matmul.
    w5t = xv_ref[B + 3 * L:B + 3 * L + output_size, :]                    # (out, H)
    b5 = xv_ref[B + 3 * L + output_size:B + 3 * L + output_size + 1, :]   # (1, H)

    cols = [jnp.sum(h * w5t[o:o + 1, :], axis=-1, keepdims=True)
            for o in range(output_size)]
    logits = cols[0] if output_size == 1 else jnp.concatenate(cols, axis=-1)
    logits = logits + b5[:, :output_size]
    o_ref[...] = jax.nn.sigmoid(logits)


@functools.partial(jax.jit,
                   static_argnames=("input_size", "hidden_size", "output_size"))
def solution_model_forward(x, weights, vectors, *, input_size, hidden_size,
                           output_size):
    """x: (B, input_size) f32; weights: (L, H, H) bf16; vectors: (3L+out+1, H) f32."""
    batch = x.shape[0]
    H = hidden_size
    L = NUM_HIDDEN_LAYERS

    # Pad x to lane width H and fuse it with the parameter-vector slab: a single
    # small XLA fusion in the wrapper, one fewer kernel DMA.
    x_pad = jnp.pad(x.astype(jnp.float32), ((0, 0), (0, H - input_size)))
    xv = jnp.concatenate([x_pad, vectors], axis=0)

    vmem_spec = pl.BlockSpec(memory_space=pltpu.MemorySpace.VMEM)
    kernel = functools.partial(
        mlp_kernel, batch=batch, output_size=output_size, num_hidden_layers=L)

    cost = pl.CostEstimate(
        flops=int(2 * batch * (L * H * H + H * output_size)),
        transcendentals=int(L * H + batch * output_size),  # rsqrt rows + sigmoid
        bytes_accessed=int(4 * xv.size + 2 * weights.size
                           + 4 * batch * output_size),
    )

    return pl.pallas_call(
        kernel,
        out_shape=jax.ShapeDtypeStruct((batch, output_size), jnp.float32),
        in_specs=[vmem_spec, vmem_spec],
        out_specs=vmem_spec,
        cost_estimate=cost,
    )(xv, weights)


def init_params(key, input_size, hidden_size, output_size):
    """Deterministic init mimicking nn.Linear's uniform(-1/sqrt(fan_in), ...)."""

    def linear(k, fan_in, fan_out):
        kw, kb = jax.random.split(k)
        bound = 1.0 / jnp.sqrt(float(fan_in))
        w = jax.random.uniform(kw, (fan_in, fan_out), jnp.float32, -bound, bound)
        b = jax.random.uniform(kb, (1, fan_out), jnp.float32, -bound, bound)
        return w, b

    keys = jax.random.split(key, 5)
    w1, b1 = linear(keys[0], input_size, hidden_size)
    w2, b2 = linear(keys[1], hidden_size, hidden_size)
    w3, b3 = linear(keys[2], hidden_size, hidden_size)
    w4, b4 = linear(keys[3], hidden_size, hidden_size)
    w5, b5 = linear(keys[4], hidden_size, output_size)

    ones = jnp.ones((1, hidden_size), jnp.float32)    # BatchNorm gamma default
    zeros = jnp.zeros((1, hidden_size), jnp.float32)  # BatchNorm beta default

    return (
        w1, b1, ones, zeros,
        w2, b2, ones, zeros,
        w3, b3, ones, zeros,
        w4, b4, ones, zeros,
        w5, b5,
    )


def pack_params(params, input_size, hidden_size, output_size):
    """Collapse the 18 module parameters into 2 kernel-side operands."""
    assert input_size <= hidden_size
    (w1, b1, g1, be1,
     w2, b2, g2, be2,
     w3, b3, g3, be3,
     w4, b4, g4, be4,
     w5, b5) = params
    H = hidden_size
    L = NUM_HIDDEN_LAYERS

    # bf16 MXU weight slab (w1 row-zero-padded so every hidden matmul is (B,H)@(H,H)).
    w1p = jnp.zeros((H, H), jnp.float32).at[:input_size, :].set(w1)
    weights = jnp.stack([w1p, w2, w3, w4]).astype(jnp.bfloat16)       # (L, H, H)

    def row(v):
        v = jnp.asarray(v, jnp.float32).reshape(-1)
        return jnp.zeros((H,), jnp.float32).at[:v.shape[0]].set(v)

    vectors = jnp.concatenate([
        jnp.stack([row(b1), row(b2), row(b3), row(b4)]),              # biases
        jnp.stack([row(g1), row(g2), row(g3), row(g4)]),              # gammas
        jnp.stack([row(be1), row(be2), row(be3), row(be4)]),          # betas
        jnp.asarray(w5.T, jnp.float32),                               # (out, H)
        row(b5)[None, :],                                             # (1, H)
    ], axis=0)                                                        # (3L+out+1, H)
    assert vectors.shape == (3 * L + output_size + 1, H)
    return weights, vectors


def reference_forward(x, params, *, bf16_matmul=False):
    """Pure-JAX reference mirroring the PyTorch module (optionally bf16 MXU ops)."""
    (w1, b1, g1, be1,
     w2, b2, g2, be2,
     w3, b3, g3, be3,
     w4, b4, g4, be4,
     w5, b5) = params

    def dot(a, w):
        if bf16_matmul:
            return jnp.dot(a.astype(jnp.bfloat16), w.astype(jnp.bfloat16),
                           preferred_element_type=jnp.float32)
        return jnp.dot(a, w, preferred_element_type=jnp.float32)

    def bn(v, g, be):
        mean = jnp.mean(v, axis=0, keepdims=True)
        var = jnp.mean((v - mean) * (v - mean), axis=0, keepdims=True)
        return (v - mean) * jax.lax.rsqrt(var + BN_EPS) * g + be

    def block(h, w, b, g, be):
        h = dot(h, w) + b
        h = jnp.clip(h, 0.0, 6.0)
        return bn(h, g, be)

    h = block(x, w1, b1, g1, be1)
    h = block(h, w2, b2, g2, be2)
    h = block(h, w3, b3, g3, be3)
    h = block(h, w4, b4, g4, be4)
    return jax.nn.sigmoid(jnp.dot(h, w5, preferred_element_type=jnp.float32) + b5)


if __name__ == "__main__":
    batch = 8
    input_size = 16
    hidden_size = 32
    output_size = 1

    key = jax.random.PRNGKey(0)
    k_x, k_p = jax.random.split(key)

    x = jax.random.normal(k_x, (batch, input_size), jnp.float32)
    params = init_params(k_p, input_size, hidden_size, output_size)
    weights, vectors = pack_params(params, input_size, hidden_size, output_size)

    out = solution_model_forward(
        x, weights, vectors,
        input_size=input_size, hidden_size=hidden_size, output_size=output_size)
    out = jax.block_until_ready(out)
    assert out.shape == (batch, output_size)
    assert bool(jnp.all(jnp.isfinite(out)))

    # Primary check: against a reference with the same bf16 MXU operands (tight);
    # only the single-pass-variance reform and op ordering differ.
    ref_bf16 = reference_forward(x, params, bf16_matmul=True)
    assert jnp.allclose(out, ref_bf16, atol=2e-3, rtol=2e-3), (out, ref_bf16)

    # Sanity check: against the exact f32 module semantics (loose, covers the
    # deliberate bf16-weight quantization of the MXU operands).
    ref_f32 = reference_forward(x, params, bf16_matmul=False)
    assert jnp.allclose(out, ref_f32, atol=5e-2, rtol=5e-2), (out, ref_f32)

    print("KERNEL_OK")
</pallas_src>

<mosaic_0001>
module attributes {stable_mosaic.version = 11 : i64} {
  func.func @mlp_kernel(%arg0: memref<22x32xf32, #tpu.memory_space<vmem>>, %arg1: memref<4x32x32xbf16, #tpu.memory_space<vmem>>, %arg2: memref<8x1xf32, #tpu.memory_space<vmem>>) attributes {dimension_semantics = [], scalar_prefetch = 0 : i64, scratch_operands = 0 : i64, tpu.core_type = #tpu.core_type<tc>} {
    %c0 = arith.constant 0 : index
    %c0_0 = arith.constant 0 : index
    %0 = vector.load %arg0[%c0, %c0_0] : memref<22x32xf32, #tpu.memory_space<vmem>>, vector<8x32xf32>
    %c0_1 = arith.constant 0 : index
    %c0_2 = arith.constant 0 : index
    %c0_3 = arith.constant 0 : index
    %1 = vector.load %arg1[%c0_1, %c0_2, %c0_3] : memref<4x32x32xbf16, #tpu.memory_space<vmem>>, vector<1x32x32xbf16>
    %2 = vector.shape_cast %1 : vector<1x32x32xbf16> to vector<32x32xbf16>
    %c8 = arith.constant 8 : index
    %c0_4 = arith.constant 0 : index
    %3 = vector.load %arg0[%c8, %c0_4] : memref<22x32xf32, #tpu.memory_space<vmem>>, vector<1x32xf32>
    %c12 = arith.constant 12 : index
    %c0_5 = arith.constant 0 : index
    %4 = vector.load %arg0[%c12, %c0_5] : memref<22x32xf32, #tpu.memory_space<vmem>>, vector<1x32xf32>
    %c16 = arith.constant 16 : index
    %c0_6 = arith.constant 0 : index
    %5 = vector.load %arg0[%c16, %c0_6] : memref<22x32xf32, #tpu.memory_space<vmem>>, vector<1x32xf32>
    %6 = arith.truncf %0 : vector<8x32xf32> to vector<8x32xbf16>
    %cst = arith.constant dense<0.000000e+00> : vector<8x32xf32>
    %7 = tpu.matmul %6, %2, %cst {dimension_numbers = #tpu.dot_dimension_numbers<[1], [0], [0], [1], [0, 0, 1, 1], [], []>} : vector<8x32xbf16>, vector<32x32xbf16>, vector<8x32xf32> -> vector<8x32xf32>
    %8 = vector.broadcast %3 : vector<1x32xf32> to vector<8x32xf32>
    %9 = arith.addf %7, %8 : vector<8x32xf32>
    %cst_7 = arith.constant 0.000000e+00 : f32
    %cst_8 = arith.constant 6.000000e+00 : f32
    %10 = vector.broadcast %cst_7 : f32 to vector<8x32xf32>
    %11 = arith.maximumf %10, %9 : vector<8x32xf32>
    %12 = vector.broadcast %cst_8 : f32 to vector<8x32xf32>
    %13 = arith.minimumf %12, %11 : vector<8x32xf32>
    %cst_9 = arith.constant dense<0.000000e+00> : vector<32xf32>
    %14 = vector.multi_reduction <add>, %13, %cst_9 [0] : vector<8x32xf32> to vector<32xf32>
    %15 = vector.shape_cast %14 : vector<32xf32> to vector<1x32xf32>
    %cst_10 = arith.constant 8.000000e+00 : f32
    %16 = vector.broadcast %cst_10 : f32 to vector<1x32xf32>
    %17 = arith.divf %15, %16 : vector<1x32xf32>
    %18 = arith.mulf %13, %13 : vector<8x32xf32>
    %cst_11 = arith.constant dense<0.000000e+00> : vector<32xf32>
    %19 = vector.multi_reduction <add>, %18, %cst_11 [0] : vector<8x32xf32> to vector<32xf32>
    %20 = vector.shape_cast %19 : vector<32xf32> to vector<1x32xf32>
    %cst_12 = arith.constant 8.000000e+00 : f32
    %21 = vector.broadcast %cst_12 : f32 to vector<1x32xf32>
    %22 = arith.divf %20, %21 : vector<1x32xf32>
    %23 = arith.mulf %17, %17 : vector<1x32xf32>
    %24 = arith.subf %22, %23 : vector<1x32xf32>
    %cst_13 = arith.constant 0.000000e+00 : f32
    %25 = vector.broadcast %cst_13 : f32 to vector<1x32xf32>
    %26 = arith.maximumf %24, %25 : vector<1x32xf32>
    %cst_14 = arith.constant 9.99999974E-6 : f32
    %27 = vector.broadcast %cst_14 : f32 to vector<1x32xf32>
    %28 = arith.addf %26, %27 : vector<1x32xf32>
    %29 = math.rsqrt %28 : vector<1x32xf32>
    %30 = arith.mulf %4, %29 : vector<1x32xf32>
    %31 = arith.mulf %17, %30 : vector<1x32xf32>
    %32 = arith.subf %5, %31 : vector<1x32xf32>
    %33 = vector.broadcast %30 : vector<1x32xf32> to vector<8x32xf32>
    %34 = arith.mulf %13, %33 : vector<8x32xf32>
    %35 = vector.broadcast %32 : vector<1x32xf32> to vector<8x32xf32>
    %36 = arith.addf %34, %35 : vector<8x32xf32>
    %c1 = arith.constant 1 : index
    %c0_15 = arith.constant 0 : index
    %c0_16 = arith.constant 0 : index
    %37 = vector.load %arg1[%c1, %c0_15, %c0_16] : memref<4x32x32xbf16, #tpu.memory_space<vmem>>, vector<1x32x32xbf16>
    %38 = vector.shape_cast %37 : vector<1x32x32xbf16> to vector<32x32xbf16>
    %c9 = arith.constant 9 : index
    %c0_17 = arith.constant 0 : index
    %39 = vector.load %arg0[%c9, %c0_17] : memref<22x32xf32, #tpu.memory_space<vmem>>, vector<1x32xf32>
    %c13 = arith.constant 13 : index
    %c0_18 = arith.constant 0 : index
    %40 = vector.load %arg0[%c13, %c0_18] : memref<22x32xf32, #tpu.memory_space<vmem>>, vector<1x32xf32>
    %c17 = arith.constant 17 : index
    %c0_19 = arith.constant 0 : index
    %41 = vector.load %arg0[%c17, %c0_19] : memref<22x32xf32, #tpu.memory_space<vmem>>, vector<1x32xf32>
    %42 = arith.truncf %36 : vector<8x32xf32> to vector<8x32xbf16>
    %cst_20 = arith.constant dense<0.000000e+00> : vector<8x32xf32>
    %43 = tpu.matmul %42, %38, %cst_20 {dimension_numbers = #tpu.dot_dimension_numbers<[1], [0], [0], [1], [0, 0, 1, 1], [], []>} : vector<8x32xbf16>, vector<32x32xbf16>, vector<8x32xf32> -> vector<8x32xf32>
    %44 = vector.broadcast %39 : vector<1x32xf32> to vector<8x32xf32>
    %45 = arith.addf %43, %44 : vector<8x32xf32>
    %cst_21 = arith.constant 0.000000e+00 : f32
    %cst_22 = arith.constant 6.000000e+00 : f32
    %46 = vector.broadcast %cst_21 : f32 to vector<8x32xf32>
    %47 = arith.maximumf %46, %45 : vector<8x32xf32>
    %48 = vector.broadcast %cst_22 : f32 to vector<8x32xf32>
    %49 = arith.minimumf %48, %47 : vector<8x32xf32>
    %cst_23 = arith.constant dense<0.000000e+00> : vector<32xf32>
    %50 = vector.multi_reduction <add>, %49, %cst_23 [0] : vector<8x32xf32> to vector<32xf32>
    %51 = vector.shape_cast %50 : vector<32xf32> to vector<1x32xf32>
    %cst_24 = arith.constant 8.000000e+00 : f32
    %52 = vector.broadcast %cst_24 : f32 to vector<1x32xf32>
    %53 = arith.divf %51, %52 : vector<1x32xf32>
    %54 = arith.mulf %49, %49 : vector<8x32xf32>
    %cst_25 = arith.constant dense<0.000000e+00> : vector<32xf32>
    %55 = vector.multi_reduction <add>, %54, %cst_25 [0] : vector<8x32xf32> to vector<32xf32>
    %56 = vector.shape_cast %55 : vector<32xf32> to vector<1x32xf32>
    %cst_26 = arith.constant 8.000000e+00 : f32
    %57 = vector.broadcast %cst_26 : f32 to vector<1x32xf32>
    %58 = arith.divf %56, %57 : vector<1x32xf32>
    %59 = arith.mulf %53, %53 : vector<1x32xf32>
    %60 = arith.subf %58, %59 : vector<1x32xf32>
    %cst_27 = arith.constant 0.000000e+00 : f32
    %61 = vector.broadcast %cst_27 : f32 to vector<1x32xf32>
    %62 = arith.maximumf %60, %61 : vector<1x32xf32>
    %cst_28 = arith.constant 9.99999974E-6 : f32
    %63 = vector.broadcast %cst_28 : f32 to vector<1x32xf32>
    %64 = arith.addf %62, %63 : vector<1x32xf32>
    %65 = math.rsqrt %64 : vector<1x32xf32>
    %66 = arith.mulf %40, %65 : vector<1x32xf32>
    %67 = arith.mulf %53, %66 : vector<1x32xf32>
    %68 = arith.subf %41, %67 : vector<1x32xf32>
    %69 = vector.broadcast %66 : vector<1x32xf32> to vector<8x32xf32>
    %70 = arith.mulf %49, %69 : vector<8x32xf32>
    %71 = vector.broadcast %68 : vector<1x32xf32> to vector<8x32xf32>
    %72 = arith.addf %70, %71 : vector<8x32xf32>
    %c2 = arith.constant 2 : index
    %c0_29 = arith.constant 0 : index
    %c0_30 = arith.constant 0 : index
    %73 = vector.load %arg1[%c2, %c0_29, %c0_30] : memref<4x32x32xbf16, #tpu.memory_space<vmem>>, vector<1x32x32xbf16>
    %74 = vector.shape_cast %73 : vector<1x32x32xbf16> to vector<32x32xbf16>
    %c10 = arith.constant 10 : index
    %c0_31 = arith.constant 0 : index
    %75 = vector.load %arg0[%c10, %c0_31] : memref<22x32xf32, #tpu.memory_space<vmem>>, vector<1x32xf32>
    %c14 = arith.constant 14 : index
    %c0_32 = arith.constant 0 : index
    %76 = vector.load %arg0[%c14, %c0_32] : memref<22x32xf32, #tpu.memory_space<vmem>>, vector<1x32xf32>
    %c18 = arith.constant 18 : index
    %c0_33 = arith.constant 0 : index
    %77 = vector.load %arg0[%c18, %c0_33] : memref<22x32xf32, #tpu.memory_space<vmem>>, vector<1x32xf32>
    %78 = arith.truncf %72 : vector<8x32xf32> to vector<8x32xbf16>
    %cst_34 = arith.constant dense<0.000000e+00> : vector<8x32xf32>
    %79 = tpu.matmul %78, %74, %cst_34 {dimension_numbers = #tpu.dot_dimension_numbers<[1], [0], [0], [1], [0, 0, 1, 1], [], []>} : vector<8x32xbf16>, vector<32x32xbf16>, vector<8x32xf32> -> vector<8x32xf32>
    %80 = vector.broadcast %75 : vector<1x32xf32> to vector<8x32xf32>
    %81 = arith.addf %79, %80 : vector<8x32xf32>
    %cst_35 = arith.constant 0.000000e+00 : f32
    %cst_36 = arith.constant 6.000000e+00 : f32
    %82 = vector.broadcast %cst_35 : f32 to vector<8x32xf32>
    %83 = arith.maximumf %82, %81 : vector<8x32xf32>
    %84 = vector.broadcast %cst_36 : f32 to vector<8x32xf32>
    %85 = arith.minimumf %84, %83 : vector<8x32xf32>
    %cst_37 = arith.constant dense<0.000000e+00> : vector<32xf32>
    %86 = vector.multi_reduction <add>, %85, %cst_37 [0] : vector<8x32xf32> to vector<32xf32>
    %87 = vector.shape_cast %86 : vector<32xf32> to vector<1x32xf32>
    %cst_38 = arith.constant 8.000000e+00 : f32
    %88 = vector.broadcast %cst_38 : f32 to vector<1x32xf32>
    %89 = arith.divf %87, %88 : vector<1x32xf32>
    %90 = arith.mulf %85, %85 : vector<8x32xf32>
    %cst_39 = arith.constant dense<0.000000e+00> : vector<32xf32>
    %91 = vector.multi_reduction <add>, %90, %cst_39 [0] : vector<8x32xf32> to vector<32xf32>
    %92 = vector.shape_cast %91 : vector<32xf32> to vector<1x32xf32>
    %cst_40 = arith.constant 8.000000e+00 : f32
    %93 = vector.broadcast %cst_40 : f32 to vector<1x32xf32>
    %94 = arith.divf %92, %93 : vector<1x32xf32>
    %95 = arith.mulf %89, %89 : vector<1x32xf32>
    %96 = arith.subf %94, %95 : vector<1x32xf32>
    %cst_41 = arith.constant 0.000000e+00 : f32
    %97 = vector.broadcast %cst_41 : f32 to vector<1x32xf32>
    %98 = arith.maximumf %96, %97 : vector<1x32xf32>
    %cst_42 = arith.constant 9.99999974E-6 : f32
    %99 = vector.broadcast %cst_42 : f32 to vector<1x32xf32>
    %100 = arith.addf %98, %99 : vector<1x32xf32>
    %101 = math.rsqrt %100 : vector<1x32xf32>
    %102 = arith.mulf %76, %101 : vector<1x32xf32>
    %103 = arith.mulf %89, %102 : vector<1x32xf32>
    %104 = arith.subf %77, %103 : vector<1x32xf32>
    %105 = vector.broadcast %102 : vector<1x32xf32> to vector<8x32xf32>
    %106 = arith.mulf %85, %105 : vector<8x32xf32>
    %107 = vector.broadcast %104 : vector<1x32xf32> to vector<8x32xf32>
    %108 = arith.addf %106, %107 : vector<8x32xf32>
    %c3 = arith.constant 3 : index
    %c0_43 = arith.constant 0 : index
    %c0_44 = arith.constant 0 : index
    %109 = vector.load %arg1[%c3, %c0_43, %c0_44] : memref<4x32x32xbf16, #tpu.memory_space<vmem>>, vector<1x32x32xbf16>
    %110 = vector.shape_cast %109 : vector<1x32x32xbf16> to vector<32x32xbf16>
    %c11 = arith.constant 11 : index
    %c0_45 = arith.constant 0 : index
    %111 = vector.load %arg0[%c11, %c0_45] : memref<22x32xf32, #tpu.memory_space<vmem>>, vector<1x32xf32>
    %c15 = arith.constant 15 : index
    %c0_46 = arith.constant 0 : index
    %112 = vector.load %arg0[%c15, %c0_46] : memref<22x32xf32, #tpu.memory_space<vmem>>, vector<1x32xf32>
    %c19 = arith.constant 19 : index
    %c0_47 = arith.constant 0 : index
    %113 = vector.load %arg0[%c19, %c0_47] : memref<22x32xf32, #tpu.memory_space<vmem>>, vector<1x32xf32>
    %114 = arith.truncf %108 : vector<8x32xf32> to vector<8x32xbf16>
    %cst_48 = arith.constant dense<0.000000e+00> : vector<8x32xf32>
    %115 = tpu.matmul %114, %110, %cst_48 {dimension_numbers = #tpu.dot_dimension_numbers<[1], [0], [0], [1], [0, 0, 1, 1], [], []>} : vector<8x32xbf16>, vector<32x32xbf16>, vector<8x32xf32> -> vector<8x32xf32>
    %116 = vector.broadcast %111 : vector<1x32xf32> to vector<8x32xf32>
    %117 = arith.addf %115, %116 : vector<8x32xf32>
    %cst_49 = arith.constant 0.000000e+00 : f32
    %cst_50 = arith.constant 6.000000e+00 : f32
    %118 = vector.broadcast %cst_49 : f32 to vector<8x32xf32>
    %119 = arith.maximumf %118, %117 : vector<8x32xf32>
    %120 = vector.broadcast %cst_50 : f32 to vector<8x32xf32>
    %121 = arith.minimumf %120, %119 : vector<8x32xf32>
    %cst_51 = arith.constant dense<0.000000e+00> : vector<32xf32>
    %122 = vector.multi_reduction <add>, %121, %cst_51 [0] : vector<8x32xf32> to vector<32xf32>
    %123 = vector.shape_cast %122 : vector<32xf32> to vector<1x32xf32>
    %cst_52 = arith.constant 8.000000e+00 : f32
    %124 = vector.broadcast %cst_52 : f32 to vector<1x32xf32>
    %125 = arith.divf %123, %124 : vector<1x32xf32>
    %126 = arith.mulf %121, %121 : vector<8x32xf32>
    %cst_53 = arith.constant dense<0.000000e+00> : vector<32xf32>
    %127 = vector.multi_reduction <add>, %126, %cst_53 [0] : vector<8x32xf32> to vector<32xf32>
    %128 = vector.shape_cast %127 : vector<32xf32> to vector<1x32xf32>
    %cst_54 = arith.constant 8.000000e+00 : f32
    %129 = vector.broadcast %cst_54 : f32 to vector<1x32xf32>
    %130 = arith.divf %128, %129 : vector<1x32xf32>
    %131 = arith.mulf %125, %125 : vector<1x32xf32>
    %132 = arith.subf %130, %131 : vector<1x32xf32>
    %cst_55 = arith.constant 0.000000e+00 : f32
    %133 = vector.broadcast %cst_55 : f32 to vector<1x32xf32>
    %134 = arith.maximumf %132, %133 : vector<1x32xf32>
    %cst_56 = arith.constant 9.99999974E-6 : f32
    %135 = vector.broadcast %cst_56 : f32 to vector<1x32xf32>
    %136 = arith.addf %134, %135 : vector<1x32xf32>
    %137 = math.rsqrt %136 : vector<1x32xf32>
    %138 = arith.mulf %112, %137 : vector<1x32xf32>
    %139 = arith.mulf %125, %138 : vector<1x32xf32>
    %140 = arith.subf %113, %139 : vector<1x32xf32>
    %141 = vector.broadcast %138 : vector<1x32xf32> to vector<8x32xf32>
    %142 = arith.mulf %121, %141 : vector<8x32xf32>
    %143 = vector.broadcast %140 : vector<1x32xf32> to vector<8x32xf32>
    %144 = arith.addf %142, %143 : vector<8x32xf32>
    %c20 = arith.constant 20 : index
    %c0_57 = arith.constant 0 : index
    %145 = vector.load %arg0[%c20, %c0_57] : memref<22x32xf32, #tpu.memory_space<vmem>>, vector<1x32xf32>
    %c21 = arith.constant 21 : index
    %c0_58 = arith.constant 0 : index
    %146 = vector.load %arg0[%c21, %c0_58] : memref<22x32xf32, #tpu.memory_space<vmem>>, vector<1x32xf32>
    %147 = vector.broadcast %145 : vector<1x32xf32> to vector<8x32xf32>
    %148 = arith.mulf %144, %147 : vector<8x32xf32>
    %cst_59 = arith.constant dense<0.000000e+00> : vector<8xf32>
    %149 = vector.multi_reduction <add>, %148, %cst_59 [1] : vector<8x32xf32> to vector<8xf32>
    %150 = vector.shape_cast %149 : vector<8xf32> to vector<8x1xf32>
    %151 = vector.extract_strided_slice %146 {offsets = [0, 0], sizes = [1, 1], strides = [1, 1]} : vector<1x32xf32> to vector<1x1xf32>
    %152 = vector.broadcast %151 : vector<1x1xf32> to vector<8x1xf32>
    %153 = arith.addf %150, %152 : vector<8x1xf32>
    %154 = arith.negf %153 : vector<8x1xf32>
    %155 = math.exp %154 : vector<8x1xf32>
    %cst_60 = arith.constant 1.000000e+00 : f32
    %156 = vector.broadcast %cst_60 : f32 to vector<8x1xf32>
    %157 = arith.addf %156, %155 : vector<8x1xf32>
    %158 = arith.divf %156, %157 : vector<8x1xf32>
    %c0_61 = arith.constant 0 : index
    %c0_62 = arith.constant 0 : index
    %159 = vector.load %arg2[%c0_61, %c0_62] : memref<8x1xf32, #tpu.memory_space<vmem>>, vector<8x1xf32>
    tpu.vector_store %arg2[%c0_61, %c0_62], %158 {strides = array<i32>} : memref<8x1xf32, #tpu.memory_space<vmem>>, vector<8x1xf32>,
    return
  }
}

</mosaic_0001>

<llo_original>
// kernel: solution_model_forward.1
$region0: #{solution_model_forward.1}
  #allocation0 [shape = 'u32[]', space=smem, size = 0x4, offset = 0x4, fixed_abs, tag = 'smem constant byte address 0x4 - core index']
  #allocation1 [shape = 'u32[72,128]{1,0:T(1,128)}', space=vmem, size = 0x9000, scoped, tag = 'internal scratch']
  %s0 = inlined_call_operand.vmem [shape: f32[22,32], index: 0, kind: input, shape index: {}]
  %s1 = inlined_call_operand.hbm [shape: bf16[4,32,32], index: 1, kind: input, shape index: {}]
  %s2 = inlined_call_operand.vmem [shape: f32[8,1], index: 2, kind: output, shape index: {}]
  %s3 = sld [smem:[#allocation0]]
  $region22: #{solution_model_forward.1} parent=0
    _
  %s5 = ssub.s32 1, %s3
  %s6 = scalar_select 0, %s5, %s3
  $region1: #{solution_model_forward.1} parent=0
    #allocation2 [shape = 'u8[32768]{0}', space=vmem, size = 0x8000, scoped, tag = 'input window, operand 1, single buffered']
    #allocation3 [shape = 's32[1]{0}', space=sflag, size = 0x4, scoped, tag = 'scoped memory for solution_model_forward.1']
    %7 = vsyncpa [#allocation3], 0
    // Predicated region
    $region2: #{solution_model_forward.1} parent=1 // pred_check
      _
    $region3: #{solution_model_forward.1} parent=1 // pred_check_branch
      %9 = sbr.rel (0) target = $region5
    $region4: #{solution_model_forward.1} parent=1 // pred_region
      _
    $region5: #{solution_model_forward.1} parent=1 // pred_fallthru
      _
    // Predicated region
    $region6: #{solution_model_forward.1} parent=1 // pred_check
      _
    $region7: #{solution_model_forward.1} parent=1 // pred_check_branch
      %11 = sbr.rel (0) target = $region9
    $region8: #{solution_model_forward.1} parent=1 // pred_region
      %13 = vsyncadd [#allocation3], 0
      %s14 = sshll.u32 %s1, 4
      %s15 = int_to_ptr.hbm [resolvable:$true] %s14
      %s16 = sshll.u32 [#allocation2], 4
      %s17 = int_to_ptr.vmem [resolvable:$true] %s16
      %22 = dma.hbm_to_vmem [thread:$0]  %s15, 1024, %s17, [#allocation3], 64, 64, 4
    $region9: #{solution_model_forward.1} parent=1 // pred_fallthru
      _
    // Predicated region
    $region10: #{solution_model_forward.1} parent=1 // pred_check
      _
    $region11: #{solution_model_forward.1} parent=1 // pred_check_branch
      %24 = sbr.rel (0) target = $region13
    $region12: #{solution_model_forward.1} parent=1 // pred_region
      %26 = dma.done [#allocation3], 1024
    $region13: #{solution_model_forward.1} parent=1 // pred_fallthru
      _
    %v28 = vld [vmem:[%s0] sm:$0xff]
    %v29 = vld [vmem:[#allocation2] sm:$0xf]
    %v30 = vld [vmem:[#allocation2 + $0x4] sm:$0xf]
    %v31 = vld [vmem:[#allocation2 + $0x8] sm:$0xf]
    %v32 = vld [vmem:[#allocation2 + $0xc] sm:$0xf]
    %v33 = vld [vmem:[%s0 + $0x8] sm:$0x1]
    %v34 = vld [vmem:[%s0 + $0xc] sm:$0x1]
    %v35 = vld [vmem:[%s0 + $0x10] sm:$0x1]
    %v36 = vpack.c.bf16 %v28, %v28
    %v37 = vperm.slane %v33, 0
    %v42 = vunpack.c.l.b16 %v29
    %v43 = vunpack.c.l.b16 %v30
    %v44 = vunpack.c.l.b16 %v31
    %v45 = vunpack.c.l.b16 %v32
    %v46 = vpack.c.b16 %v43, %v42
    %v47 = vpack.c.b16 %v45, %v44
    %vm50 = vcmask 261120
    %v52 = vsel %vm50, %v36, 0
    %54 = vmatpush.bf16.msra.mxu0 0
    %55 = vmatpush.bf16.msra.mxu0 0
    %56 = vmatpush.bf16.msra.mxu0 0
    %57 = vmatpush.bf16.msra.mxu0 0
    %58 = vmatpush.bf16.msra.mxu0 0
    %59 = vmatpush.bf16.msra.mxu0 0
    %60 = vmatpush.bf16.msra.mxu0 %v47
    %61 = vmatpush.bf16.msra.mxu0 %v46
    %62 = vmatmul.bf16.gmra.mxu0 %v52
    %v63 = vpop.f32.mrf.mxu0
    %v64 = vadd.f32 %v37, %v63
    %v65 = vpop.f32.mrf.mxu0
    %66 = vdwg.mxu0
    %v67 = vmax.f32 %v64, 0.0
    %v68 = vmin.f32 %v67, 6.0
    %v69 = vsel %vm50, %v68, 0.0
    %v70 = vrot.slane %v69, 4
    %v71 = vadd.f32 %v69, %v70
    %v72 = vrot.slane %v71, 2
    %v73 = vadd.f32 %v71, %v72
    %v74 = vrot.slane %v73, 1
    %v75 = vadd.f32 %v73, %v74
    %v76 = vrcp.pop 8.0
    %v77 = vmul.f32 8.0, %v76
    %v78 = vsub.f32 1.0, %v77
    %v79 = vmul.f32 %v76, %v78
    %v80 = vadd.f32 %v76, %v79
    %vm81 = vweird.f32 %v76
    %v82 = vsel %vm81, %v76, %v80
    %v83 = vmul.f32 %v75, %v82
    %v84 = vmul.f32 %v68, %v68
    %v85 = vsel %vm50, %v84, 0.0
    %v86 = vrot.slane %v85, 4
    %v87 = vadd.f32 %v85, %v86
    %v88 = vrot.slane %v87, 2
    %v89 = vadd.f32 %v87, %v88
    %v90 = vrot.slane %v89, 1
    %v91 = vadd.f32 %v89, %v90
    %v92 = vmul.f32 %v91, %v82
    %v93 = vmul.f32 %v83, %v83
    %v94 = vsub.f32 %v92, %v93
    %v95 = vmax.f32 %v94, 0.0
    %v96 = vadd.f32 %v95, 1e-05
    %v97 = vrsqrt.pop %v96
    %v98 = vmul.f32 %v97, %v96
    %v99 = vmul.f32 %v98, %v97
    %v100 = vmul.f32 0.5, %v99
    %v101 = vsub.f32 1.5, %v100
    %v102 = vmul.f32 %v97, %v101
    %vm103 = vweird.f32 %v96
    %vm104 = vweird.f32 %v97
    %vm105 = vmor %vm103, %vm104
    %v106 = vsel %vm105, %v97, %v102
    %v107 = vmul.f32 %v34, %v106
    %v108 = vmul.f32 %v83, %v107
    %v109 = vsub.f32 %v35, %v108
    %v110 = vperm.slane %v107, 0
    %v111 = vmul.f32 %v68, %v110
    %v112 = vperm.slane %v109, 0
    %v113 = vadd.f32 %v111, %v112
    %s114 = scalar_lea.vmem [#allocation2], 16
    %v115 = vld [vmem:[%s114] sm:$0xf]
    %v116 = vld [vmem:[%s114 + $0x4] sm:$0xf]
    %v117 = vld [vmem:[%s114 + $0x8] sm:$0xf]
    %v118 = vld [vmem:[%s114 + $0xc] sm:$0xf]
    %v119 = vld [vmem:[%s0 + $0x9] sm:$0x1]
    %v120 = vld [vmem:[%s0 + $0xd] sm:$0x1]
    %v121 = vld [vmem:[%s0 + $0x11] sm:$0x1]
    %v122 = vpack.c.bf16 %v113, %v113
    %v123 = vperm.slane %v119, 0
    %v128 = vunpack.c.l.b16 %v115
    %v129 = vunpack.c.l.b16 %v116
    %v130 = vunpack.c.l.b16 %v117
    %v131 = vunpack.c.l.b16 %v118
    %v132 = vpack.c.b16 %v129, %v128
    %v133 = vpack.c.b16 %v131, %v130
    %v137 = vsel %vm50, %v122, 0
    %139 = vmatpush.bf16.msra.mxu0 0
    %140 = vmatpush.bf16.msra.mxu0 0
    %141 = vmatpush.bf16.msra.mxu0 0
    %142 = vmatpush.bf16.msra.mxu0 0
    %143 = vmatpush.bf16.msra.mxu0 0
    %144 = vmatpush.bf16.msra.mxu0 0
    %145 = vmatpush.bf16.msra.mxu0 %v133
    %146 = vmatpush.bf16.msra.mxu0 %v132
    %147 = vmatmul.bf16.gmra.mxu0 %v137
    %v148 = vpop.f32.mrf.mxu0
    %v149 = vadd.f32 %v123, %v148
    %v150 = vpop.f32.mrf.mxu0
    %151 = vdwg.mxu0
    %v152 = vmax.f32 %v149, 0.0
    %v153 = vmin.f32 %v152, 6.0
    %v154 = vsel %vm50, %v153, 0.0
    %v155 = vrot.slane %v154, 4
    %v156 = vadd.f32 %v154, %v155
    %v157 = vrot.slane %v156, 2
    %v158 = vadd.f32 %v156, %v157
    %v159 = vrot.slane %v158, 1
    %v160 = vadd.f32 %v158, %v159
    %v161 = vmul.f32 %v160, %v82
    %v162 = vmul.f32 %v153, %v153
    %v163 = vsel %vm50, %v162, 0.0
    %v164 = vrot.slane %v163, 4
    %v165 = vadd.f32 %v163, %v164
    %v166 = vrot.slane %v165, 2
    %v167 = vadd.f32 %v165, %v166
    %v168 = vrot.slane %v167, 1
    %v169 = vadd.f32 %v167, %v168
    %v170 = vmul.f32 %v169, %v82
    %v171 = vmul.f32 %v161, %v161
    %v172 = vsub.f32 %v170, %v171
    %v173 = vmax.f32 %v172, 0.0
    %v174 = vadd.f32 %v173, 1e-05
    %v175 = vrsqrt.pop %v174
    %v176 = vmul.f32 %v175, %v174
    %v177 = vmul.f32 %v176, %v175
    %v178 = vmul.f32 0.5, %v177
    %v179 = vsub.f32 1.5, %v178
    %v180 = vmul.f32 %v175, %v179
    %vm181 = vweird.f32 %v174
    %vm182 = vweird.f32 %v175
    %vm183 = vmor %vm181, %vm182
    %v184 = vsel %vm183, %v175, %v180
    %v185 = vmul.f32 %v120, %v184
    %v186 = vmul.f32 %v161, %v185
    %v187 = vsub.f32 %v121, %v186
    %v188 = vperm.slane %v185, 0
    %v189 = vmul.f32 %v153, %v188
    %v190 = vperm.slane %v187, 0
    %v191 = vadd.f32 %v189, %v190
    %s192 = scalar_lea.vmem [#allocation2], 32
    %v193 = vld [vmem:[%s192] sm:$0xf]
    %v194 = vld [vmem:[%s192 + $0x4] sm:$0xf]
    %v195 = vld [vmem:[%s192 + $0x8] sm:$0xf]
    %v196 = vld [vmem:[%s192 + $0xc] sm:$0xf]
    %v197 = vld [vmem:[%s0 + $0xa] sm:$0x1]
    %v198 = vld [vmem:[%s0 + $0xe] sm:$0x1]
    %v199 = vld [vmem:[%s0 + $0x12] sm:$0x1]
    %v200 = vpack.c.bf16 %v191, %v191
    %v201 = vperm.slane %v197, 0
    %v206 = vunpack.c.l.b16 %v193
    %v207 = vunpack.c.l.b16 %v194
    %v208 = vunpack.c.l.b16 %v195
    %v209 = vunpack.c.l.b16 %v196
    %v210 = vpack.c.b16 %v207, %v206
    %v211 = vpack.c.b16 %v209, %v208
    %v215 = vsel %vm50, %v200, 0
    %217 = vmatpush.bf16.msra.mxu0 0
    %218 = vmatpush.bf16.msra.mxu0 0
    %219 = vmatpush.bf16.msra.mxu0 0
    %220 = vmatpush.bf16.msra.mxu0 0
    %221 = vmatpush.bf16.msra.mxu0 0
    %222 = vmatpush.bf16.msra.mxu0 0
    %223 = vmatpush.bf16.msra.mxu0 %v211
    %224 = vmatpush.bf16.msra.mxu0 %v210
    %225 = vmatmul.bf16.gmra.mxu0 %v215
    %v226 = vpop.f32.mrf.mxu0
    %v227 = vadd.f32 %v201, %v226
    %v228 = vpop.f32.mrf.mxu0
    %229 = vdwg.mxu0
    %v230 = vmax.f32 %v227, 0.0
    %v231 = vmin.f32 %v230, 6.0
    %v232 = vsel %vm50, %v231, 0.0
    %v233 = vrot.slane %v232, 4
    %v234 = vadd.f32 %v232, %v233
    %v235 = vrot.slane %v234, 2
    %v236 = vadd.f32 %v234, %v235
    %v237 = vrot.slane %v236, 1
    %v238 = vadd.f32 %v236, %v237
    %v239 = vmul.f32 %v238, %v82
    %v240 = vmul.f32 %v231, %v231
    %v241 = vsel %vm50, %v240, 0.0
    %v242 = vrot.slane %v241, 4
    %v243 = vadd.f32 %v241, %v242
    %v244 = vrot.slane %v243, 2
    %v245 = vadd.f32 %v243, %v244
    %v246 = vrot.slane %v245, 1
    %v247 = vadd.f32 %v245, %v246
    %v248 = vmul.f32 %v247, %v82
    %v249 = vmul.f32 %v239, %v239
    %v250 = vsub.f32 %v248, %v249
    %v251 = vmax.f32 %v250, 0.0
    %v252 = vadd.f32 %v251, 1e-05
    %v253 = vrsqrt.pop %v252
    %v254 = vmul.f32 %v253, %v252
    %v255 = vmul.f32 %v254, %v253
    %v256 = vmul.f32 0.5, %v255
    %v257 = vsub.f32 1.5, %v256
    %v258 = vmul.f32 %v253, %v257
    %vm259 = vweird.f32 %v252
    %vm260 = vweird.f32 %v253
    %vm261 = vmor %vm259, %vm260
    %v262 = vsel %vm261, %v253, %v258
    %v263 = vmul.f32 %v198, %v262
    %v264 = vmul.f32 %v239, %v263
    %v265 = vsub.f32 %v199, %v264
    %v266 = vperm.slane %v263, 0
    %v267 = vmul.f32 %v231, %v266
    %v268 = vperm.slane %v265, 0
    %v269 = vadd.f32 %v267, %v268
    %s270 = scalar_lea.vmem [#allocation2], 48
    %v271 = vld [vmem:[%s270] sm:$0xf]
    %v272 = vld [vmem:[%s270 + $0x4] sm:$0xf]
    %v273 = vld [vmem:[%s270 + $0x8] sm:$0xf]
    %v274 = vld [vmem:[%s270 + $0xc] sm:$0xf]
    %v275 = vld [vmem:[%s0 + $0xb] sm:$0x1]
    %v276 = vld [vmem:[%s0 + $0xf] sm:$0x1]
    %v277 = vld [vmem:[%s0 + $0x13] sm:$0x1]
    %v278 = vpack.c.bf16 %v269, %v269
    %v279 = vperm.slane %v275, 0
    %v284 = vunpack.c.l.b16 %v271
    %v285 = vunpack.c.l.b16 %v272
    %v286 = vunpack.c.l.b16 %v273
    %v287 = vunpack.c.l.b16 %v274
    %v288 = vpack.c.b16 %v285, %v284
    %v289 = vpack.c.b16 %v287, %v286
    %v293 = vsel %vm50, %v278, 0
    %295 = vmatpush.bf16.msra.mxu0 0
    %296 = vmatpush.bf16.msra.mxu0 0
    %297 = vmatpush.bf16.msra.mxu0 0
    %298 = vmatpush.bf16.msra.mxu0 0
    %299 = vmatpush.bf16.msra.mxu0 0
    %300 = vmatpush.bf16.msra.mxu0 0
    %301 = vmatpush.bf16.msra.mxu0 %v289
    %302 = vmatpush.bf16.msra.mxu0 %v288
    %303 = vmatmul.bf16.gmra.mxu0 %v293
    %v304 = vpop.f32.mrf.mxu0
    %v305 = vadd.f32 %v279, %v304
    %v306 = vpop.f32.mrf.mxu0
    %307 = vdwg.mxu0
    %v308 = vmax.f32 %v305, 0.0
    %v309 = vmin.f32 %v308, 6.0
    %v310 = vsel %vm50, %v309, 0.0
    %v311 = vrot.slane %v310, 4
    %v312 = vadd.f32 %v310, %v311
    %v313 = vrot.slane %v312, 2
    %v314 = vadd.f32 %v312, %v313
    %v315 = vrot.slane %v314, 1
    %v316 = vadd.f32 %v314, %v315
    %v317 = vmul.f32 %v316, %v82
    %v318 = vmul.f32 %v309, %v309
    %v319 = vsel %vm50, %v318, 0.0
    %v320 = vrot.slane %v319, 4
    %v321 = vadd.f32 %v319, %v320
    %v322 = vrot.slane %v321, 2
    %v323 = vadd.f32 %v321, %v322
    %v324 = vrot.slane %v323, 1
    %v325 = vadd.f32 %v323, %v324
    %v326 = vmul.f32 %v325, %v82
    %v327 = vmul.f32 %v317, %v317
    %v328 = vsub.f32 %v326, %v327
    %v329 = vmax.f32 %v328, 0.0
    %v330 = vadd.f32 %v329, 1e-05
    %v331 = vrsqrt.pop %v330
    %v332 = vmul.f32 %v331, %v330
    %v333 = vmul.f32 %v332, %v331
    %v334 = vmul.f32 0.5, %v333
    %v335 = vsub.f32 1.5, %v334
    %v336 = vmul.f32 %v331, %v335
    %vm337 = vweird.f32 %v330
    %vm338 = vweird.f32 %v331
    %vm339 = vmor %vm337, %vm338
    %v340 = vsel %vm339, %v331, %v336
    %v341 = vmul.f32 %v276, %v340
    %v342 = vmul.f32 %v317, %v341
    %v343 = vsub.f32 %v277, %v342
    %v344 = vperm.slane %v341, 0
    %v345 = vmul.f32 %v309, %v344
    %v346 = vperm.slane %v343, 0
    %v347 = vadd.f32 %v345, %v346
    %v348 = vld [vmem:[%s0 + $0x14] sm:$0x1]
    %v349 = vld [vmem:[%s0 + $0x15] sm:$0x1]
    %v350 = vperm.slane %v348, 0
    %v351 = vmul.f32 %v347, %v350
    %v352 = vsel %vm50, %v351, 0.0
    %353 = vadd.xlane.f32.xlu0 %v352
    %v354 = vpop.xlane.xlu0 %353
    %v355 = vperm.slane %v349, 0
    %v356 = vadd.f32 %v354, %v355
    %v357 = vxor.u32 %v356, 2147483648
    %v358 = vmul.f32 %v357, 1.442695
    %v359 = vpow.pop %v358
    %v360 = vadd.f32 %v359, 1.0
    %v361 = vrcp.pop %v360
    %v362 = vmul.f32 %v360, %v361
    %v363 = vsub.f32 1.0, %v362
    %v364 = vmul.f32 %v361, %v363
    %v365 = vadd.f32 %v361, %v364
    %vm366 = vweird.f32 %v360
    %vm367 = vweird.f32 %v361
    %vm368 = vmor %vm366, %vm367
    %v369 = vsel %vm368, %v361, %v365
    %v370 = vand.u32 2147483647, %v360
    %vm371 = vcmp.eq.f32.partialorder %v370, 8.507059e+37
    %v372 = vand.u32 %v360, 2147483648
    %v373 = vor.u32 1.1754944e-38, %v372
    %v374 = vsel %vm371, %v373, %v369
    %v375 = vmul.f32 1.0, %v374
    %vm376 = vcmask 7168
    %377 = vst.msk [vmem:[%s2] sm:$0xff] %vm376, %v375
    // Predicated region
    $region14: #{solution_model_forward.1} parent=1 // pred_check
      _
    $region15: #{solution_model_forward.1} parent=1 // pred_check_branch
      %379 = sbr.rel (0) target = $region17
    $region16: #{solution_model_forward.1} parent=1 // pred_region
      _
    $region17: #{solution_model_forward.1} parent=1 // pred_fallthru
      _
    // Predicated region
    $region18: #{solution_model_forward.1} parent=1 // pred_check
      _
    $region19: #{solution_model_forward.1} parent=1 // pred_check_branch
      %381 = sbr.rel (0) target = $region21
    $region20: #{solution_model_forward.1} parent=1 // pred_region
      _
    $region21: #{solution_model_forward.1} parent=1 // pred_fallthru
      _
    %382 = vsyncpa [#allocation3], 1

</llo_original>
